<compile_context>
chip_gen: v5e
topology: v5e:2x2
jax: 0.10.0
libtpu: 0.0.40
codegen_flags: <defaults>
</compile_context>

<pallas_src>
import jax
import jax.numpy as jnp
from jax.experimental import pallas as pl
from jax.experimental.pallas import tpu as pltpu

_VMEM_LIMIT_BYTES = 32 * 1024 * 1024  # safe scoped limit on v5e/v6e/v7x


def _round_down(x, m):
    return max(m, (x // m) * m)


# ----------------------------------------------------------------------------
# Kernel 1: L2-normalize every entity embedding row except the last (padding).
# Row-tiled, pipelined, in-place (aliased output), rsqrt instead of sqrt+div.
# ----------------------------------------------------------------------------
def normalize_ent_embedding(w, *, block_rows=1024):
    n_rows, dim = w.shape

    # Keep one (r, dim) f32 block around ~4 MiB so the double-buffered
    # in+out pipeline (~4x one block) stays far below the scoped VMEM limit.
    bytes_per_row = dim * 4
    r_cap = _round_down(max(8, (4 * 1024 * 1024) // bytes_per_row), 8)
    r = min(block_rows, r_cap)
    if r >= n_rows:
        r = n_rows  # single block: block dims equal full array dims

    grid = (pl.cdiv(n_rows, r),)

    def kernel(w_ref, o_ref):
        w_blk = w_ref[...]                                        # (r, dim) f32
        # Global row ids of this tile -> exempt the padding row (last row).
        row_ids = pl.program_id(0) * r + jax.lax.broadcasted_iota(
            jnp.int32, w_blk.shape, 0)
        is_pad = row_ids == (n_rows - 1)
        sq = jnp.sum(w_blk * w_blk, axis=1, keepdims=True)        # (r, 1)
        inv = jax.lax.rsqrt(sq)                                   # EUP rsqrt
        o_ref[...] = jnp.where(is_pad, w_blk, w_blk * inv)

    return pl.pallas_call(
        kernel,
        out_shape=jax.ShapeDtypeStruct((n_rows, dim), w.dtype),
        grid=grid,
        in_specs=[pl.BlockSpec((r, dim), lambda i: (i, 0))],
        out_specs=pl.BlockSpec((r, dim), lambda i: (i, 0)),
        input_output_aliases={0: 0},  # normalize in place in HBM
        compiler_params=pltpu.CompilerParams(
            dimension_semantics=("parallel",),
            vmem_limit_bytes=_VMEM_LIMIT_BYTES,
        ),
    )(w)


# ----------------------------------------------------------------------------
# Kernel 2: fused TransE L1 distance + MarginRankingLoss (margin=5, target=-1).
# Inputs are (D, B) -> batch on the 128-lane axis, L1 reduction over sublanes,
# lane-dense (1, B) output. Tiled over the batch dimension.
# ----------------------------------------------------------------------------
def transe_margin_loss(hp, rp, tp, hn, rn, tn, *, margin=5.0, block_batch=512):
    d, b = hp.shape  # (dim, batch)

    # ~2 MiB per input block; 6 inputs x double buffer stays well under limit.
    bytes_per_col = d * 4
    tb_cap = _round_down(max(128, (2 * 1024 * 1024) // bytes_per_col), 128)
    tb = min(block_batch, tb_cap)
    if tb >= b:
        tb = b  # single block: block dims equal full array dims

    grid = (pl.cdiv(b, tb),)

    def kernel(hp_ref, rp_ref, tp_ref, hn_ref, rn_ref, tn_ref, o_ref):
        d_pos = jnp.sum(jnp.abs(hp_ref[...] + rp_ref[...] - tp_ref[...]),
                        axis=0, keepdims=True)                    # (1, tb)
        d_neg = jnp.sum(jnp.abs(hn_ref[...] + rn_ref[...] - tn_ref[...]),
                        axis=0, keepdims=True)                    # (1, tb)
        # MarginRankingLoss(margin=5, reduction='none') with target y = -1:
        #   max(0, -y*(x1 - x2) + margin) = max(0, (d_pos - d_neg) + 5)
        o_ref[...] = jnp.maximum(d_pos - d_neg + margin, 0.0)

    in_spec = pl.BlockSpec((d, tb), lambda i: (0, i))
    out = pl.pallas_call(
        kernel,
        out_shape=jax.ShapeDtypeStruct((1, b), jnp.float32),
        grid=grid,
        in_specs=[in_spec] * 6,
        out_specs=pl.BlockSpec((1, tb), lambda i: (0, i)),
        compiler_params=pltpu.CompilerParams(
            dimension_semantics=("parallel",),
            vmem_limit_bytes=_VMEM_LIMIT_BYTES,
        ),
    )(hp, rp, tp, hn, rn, tn)
    return out[0]  # (B,), matches reduction='none'


# ----------------------------------------------------------------------------
# TransE module (functional JAX version)
# ----------------------------------------------------------------------------
class TransE:
    def __init__(self, dim, ent_num, rel_num, key):
        self.dim = dim
        self.ent_num = ent_num
        self.rel_num = rel_num
        k_ent, k_rel = jax.random.split(key)
        # nn.Embedding(...).weight.data.uniform_(-1, 1): all rows (incl. the
        # padding row) end up uniform(-1, 1), since uniform_ overwrites it.
        self.ent_embedding = jax.random.uniform(
            k_ent, (ent_num + 1, dim), jnp.float32, minval=-1.0, maxval=1.0)
        self.rel_embedding = jax.random.uniform(
            k_rel, (rel_num + 1, dim), jnp.float32, minval=-1.0, maxval=1.0)

    def forward(self, positive_triplets, negative_triplets):
        # In-place row normalization (weight[:-1] /= L2 norm), kept as state.
        self.ent_embedding = normalize_ent_embedding(self.ent_embedding)

        ent_w = self.ent_embedding
        rel_w = self.rel_embedding

        # Embedding lookups (XLA glue). Transpose to (D, B) so the batch maps
        # onto the 128-lane axis inside the loss kernel.
        hp = jnp.take(ent_w, positive_triplets[0], axis=0).T
        rp = jnp.take(rel_w, positive_triplets[1], axis=0).T
        tp = jnp.take(ent_w, positive_triplets[2], axis=0).T
        hn = jnp.take(ent_w, negative_triplets[0], axis=0).T
        rn = jnp.take(rel_w, negative_triplets[1], axis=0).T
        tn = jnp.take(ent_w, negative_triplets[2], axis=0).T

        return transe_margin_loss(hp, rp, tp, hn, rn, tn)

    __call__ = forward


# Pure-JAX reference for a correctness check.
def _reference_loss(ent_w, rel_w, pos, neg, margin=5.0):
    norm = jnp.sqrt(jnp.sum(ent_w[:-1] * ent_w[:-1], axis=1, keepdims=True))
    ent_n = jnp.concatenate([ent_w[:-1] / norm, ent_w[-1:]], axis=0)

    def dist(trip):
        h = jnp.take(ent_n, trip[0], axis=0)
        r = jnp.take(rel_w, trip[1], axis=0)
        t = jnp.take(ent_n, trip[2], axis=0)
        return jnp.sum(jnp.abs(h + r - t), axis=1)

    return jnp.maximum(dist(pos) - dist(neg) + margin, 0.0)


if __name__ == "__main__":
    key = jax.random.PRNGKey(0)
    k_params, k_pos, k_neg = jax.random.split(key, 3)

    DIM = 32
    ENT_NUM = 64
    REL_NUM = 16
    BATCH = 8

    model = TransE(DIM, ENT_NUM, REL_NUM, k_params)
    ent0 = model.ent_embedding  # snapshot for the reference computation
    rel0 = model.rel_embedding

    kp_h, kp_r, kp_t = jax.random.split(k_pos, 3)
    kn_h, kn_r, kn_t = jax.random.split(k_neg, 3)
    positive_triplets = jnp.stack([
        jax.random.randint(kp_h, (BATCH,), 0, ENT_NUM, dtype=jnp.int32),
        jax.random.randint(kp_r, (BATCH,), 0, REL_NUM, dtype=jnp.int32),
        jax.random.randint(kp_t, (BATCH,), 0, ENT_NUM, dtype=jnp.int32),
    ])                                                        # (3, B)
    negative_triplets = jnp.stack([
        jax.random.randint(kn_h, (BATCH,), 0, ENT_NUM, dtype=jnp.int32),
        jax.random.randint(kn_r, (BATCH,), 0, REL_NUM, dtype=jnp.int32),
        jax.random.randint(kn_t, (BATCH,), 0, ENT_NUM, dtype=jnp.int32),
    ])                                                        # (3, B)

    loss = model(positive_triplets, negative_triplets)
    jax.block_until_ready(loss)

    assert loss.shape == (BATCH,)
    assert loss.dtype == jnp.float32
    assert bool(jnp.all(loss >= 0.0))

    ref = _reference_loss(ent0, rel0, positive_triplets, negative_triplets)
    assert bool(jnp.allclose(loss, ref, rtol=1e-4, atol=1e-4)), (loss, ref)

    print("KERNEL_OK")
</pallas_src>

<mosaic_0001>
module attributes {stable_mosaic.version = 11 : i64} {
  func.func @kernel(%arg0: i32, %arg1: memref<65x32xf32, #tpu.memory_space<vmem>>, %arg2: memref<65x32xf32, #tpu.memory_space<vmem>>) attributes {dimension_semantics = [#tpu.dimension_semantics<parallel>], iteration_bounds = array<i64: 1>, scalar_prefetch = 0 : i64, scratch_operands = 0 : i64, tpu.core_type = #tpu.core_type<tc>, window_params = [{transform_indices = @transform_0, window_bounds = array<i64: 65, 32>}, {transform_indices = @transform_1, window_bounds = array<i64: 65, 32>}]} {
    %c0 = arith.constant 0 : index
    %c0_0 = arith.constant 0 : index
    %0 = vector.load %arg1[%c0, %c0_0] : memref<65x32xf32, #tpu.memory_space<vmem>>, vector<65x32xf32>
    %c65_i32 = arith.constant 65 : i32
    %1 = arith.muli %arg0, %c65_i32 : i32
    %2 = tpu.iota {dimensions = array<i32: 0>} : vector<65x32xi32>
    %3 = vector.broadcast %1 : i32 to vector<65x32xi32>
    %4 = arith.addi %3, %2 : vector<65x32xi32>
    %c64_i32 = arith.constant 64 : i32
    %5 = vector.broadcast %c64_i32 : i32 to vector<65x32xi32>
    %6 = arith.cmpi eq, %4, %5 : vector<65x32xi32>
    %7 = arith.mulf %0, %0 : vector<65x32xf32>
    %cst = arith.constant dense<0.000000e+00> : vector<65xf32>
    %8 = vector.multi_reduction <add>, %7, %cst [1] : vector<65x32xf32> to vector<65xf32>
    %9 = vector.shape_cast %8 : vector<65xf32> to vector<65x1xf32>
    %10 = math.rsqrt %9 : vector<65x1xf32>
    %11 = vector.broadcast %10 : vector<65x1xf32> to vector<65x32xf32>
    %12 = arith.mulf %0, %11 : vector<65x32xf32>
    %13 = arith.select %6, %0, %12 : vector<65x32xi1>, vector<65x32xf32>
    %c0_1 = arith.constant 0 : index
    %c0_2 = arith.constant 0 : index
    %14 = vector.load %arg2[%c0_1, %c0_2] : memref<65x32xf32, #tpu.memory_space<vmem>>, vector<65x32xf32>
    tpu.vector_store %arg2[%c0_1, %c0_2], %13 {strides = array<i32>} : memref<65x32xf32, #tpu.memory_space<vmem>>, vector<65x32xf32>,
    return
  }
  func.func @transform_0(%arg0: i32) -> (i32, i32) {
    %c0_i32 = arith.constant 0 : i32
    %c0_i32_0 = arith.constant 0 : i32
    return %arg0, %c0_i32 : i32, i32
  }
  func.func @transform_1(%arg0: i32) -> (i32, i32) {
    %c0_i32 = arith.constant 0 : i32
    %c0_i32_0 = arith.constant 0 : i32
    return %arg0, %c0_i32 : i32, i32
  }
}

</mosaic_0001>

<llo_original>
// kernel: tpu_custom_call.1
$region0: #{tpu_custom_call.1}
  #allocation0 [shape = 'u32[]', space=smem, size = 0x4, offset = 0x4, fixed_abs, tag = 'smem constant byte address 0x4 - core index']
  #allocation1 [shape = 'u32[72,128]{1,0:T(1,128)}', space=vmem, size = 0x9000, scoped, tag = 'internal scratch']
  %s0 = inlined_call_operand.vmem [shape: f32[65,32], index: 0, kind: input, shape index: {}, may-alias: {0,1}]
  %s1 = inlined_call_operand.vmem [shape: f32[65,32], index: 1, kind: output, shape index: {}, may-alias: {0,1}]
  %s2 = sld [smem:[#allocation0]]
  $region14: #{tpu_custom_call.1} parent=0
    _
  %s4 = ssub.s32 1, %s2
  %s5 = scalar_select 0, %s4, %s2
  // Predicated region
  $region2: #{tpu_custom_call.1} parent=0 // pred_check
    _
  $region3: #{tpu_custom_call.1} parent=0 // pred_check_branch
    %7 = sbr.rel (0) target = $region5
  $region4: #{tpu_custom_call.1} parent=0 // pred_region
    _
  $region5: #{tpu_custom_call.1} parent=0 // pred_fallthru
    _
  %v8 = vld [vmem:[%s0] sm:$0xff]
  %v9 = vld [vmem:[%s0 + $0x8] sm:$0xff]
  %v10 = vld [vmem:[%s0 + $0x10] sm:$0xff]
  %v11 = vld [vmem:[%s0 + $0x18] sm:$0xff]
  %v12 = vld [vmem:[%s0 + $0x20] sm:$0xff]
  %v13 = vld [vmem:[%s0 + $0x28] sm:$0xff]
  %v14 = vld [vmem:[%s0 + $0x30] sm:$0xff]
  %v15 = vld [vmem:[%s0 + $0x38] sm:$0xff]
  %v16 = vld [vmem:[%s0 + $0x40] sm:$0x1]
  %s17 = smul.u32 0, 65
  %v18 = vlaneseq
  %v19 = vshrl.u32 %v18, 7
  %v20 = vadd.s32 %v19, 8
  %v21 = vadd.s32 %v19, 16
  %v22 = vadd.s32 %v19, 24
  %v23 = vadd.s32 %v19, 32
  %v24 = vadd.s32 %v19, 40
  %v25 = vadd.s32 %v19, 48
  %v26 = vadd.s32 %v19, 56
  %v27 = vadd.s32 %v19, 64
  %v28 = vstv %s17
  %v29 = vadd.s32 %v28, %v19
  %v30 = vadd.s32 %v28, %v20
  %v31 = vadd.s32 %v28, %v21
  %v32 = vadd.s32 %v28, %v22
  %v33 = vadd.s32 %v28, %v23
  %v34 = vadd.s32 %v28, %v24
  %v35 = vadd.s32 %v28, %v25
  %v36 = vadd.s32 %v28, %v26
  %v37 = vadd.s32 %v28, %v27
  %vm38 = vcmp.eq.s32.totalorder %v29, 64
  %vm39 = vcmp.eq.s32.totalorder %v30, 64
  %vm40 = vcmp.eq.s32.totalorder %v31, 64
  %vm41 = vcmp.eq.s32.totalorder %v32, 64
  %vm42 = vcmp.eq.s32.totalorder %v33, 64
  %vm43 = vcmp.eq.s32.totalorder %v34, 64
  %vm44 = vcmp.eq.s32.totalorder %v35, 64
  %vm45 = vcmp.eq.s32.totalorder %v36, 64
  %vm46 = vcmp.eq.s32.totalorder %v37, 64
  %v47 = vmul.f32 %v8, %v8
  %v48 = vmul.f32 %v9, %v9
  %v49 = vmul.f32 %v10, %v10
  %v50 = vmul.f32 %v11, %v11
  %v51 = vmul.f32 %v12, %v12
  %v52 = vmul.f32 %v13, %v13
  %v53 = vmul.f32 %v14, %v14
  %v54 = vmul.f32 %v15, %v15
  %v55 = vmul.f32 %v16, %v16
  %vm56 = vcmask 261120
  %v57 = vsel %vm56, %v47, 0.0
  %58 = vadd.xlane.f32.xlu0 %v57
  %v59 = vpop.xlane.xlu0 %58
  %v60 = vsel %vm56, %v48, 0.0
  %61 = vadd.xlane.f32.xlu0 %v60
  %v62 = vpop.xlane.xlu0 %61
  %v63 = vsel %vm56, %v49, 0.0
  %64 = vadd.xlane.f32.xlu0 %v63
  %v65 = vpop.xlane.xlu0 %64
  %v66 = vsel %vm56, %v50, 0.0
  %67 = vadd.xlane.f32.xlu0 %v66
  %v68 = vpop.xlane.xlu0 %67
  %v69 = vsel %vm56, %v51, 0.0
  %70 = vadd.xlane.f32.xlu0 %v69
  %v71 = vpop.xlane.xlu0 %70
  %v72 = vsel %vm56, %v52, 0.0
  %73 = vadd.xlane.f32.xlu0 %v72
  %v74 = vpop.xlane.xlu0 %73
  %v75 = vsel %vm56, %v53, 0.0
  %76 = vadd.xlane.f32.xlu0 %v75
  %v77 = vpop.xlane.xlu0 %76
  %v78 = vsel %vm56, %v54, 0.0
  %79 = vadd.xlane.f32.xlu0 %v78
  %v80 = vpop.xlane.xlu0 %79
  %vm81 = vcmask 253952
  %v82 = vsel %vm81, %v55, 0.0
  %83 = vadd.xlane.f32.xlu0 %v82
  %v84 = vpop.xlane.xlu0 %83
  %v85 = vrsqrt.pop %v59
  %v86 = vmul.f32 %v85, %v59
  %v87 = vmul.f32 %v86, %v85
  %v88 = vmul.f32 0.5, %v87
  %v89 = vsub.f32 1.5, %v88
  %v90 = vmul.f32 %v85, %v89
  %vm91 = vweird.f32 %v59
  %vm92 = vweird.f32 %v85
  %vm93 = vmor %vm91, %vm92
  %v94 = vsel %vm93, %v85, %v90
  %v95 = vrsqrt.pop %v62
  %v96 = vmul.f32 %v95, %v62
  %v97 = vmul.f32 %v96, %v95
  %v98 = vmul.f32 0.5, %v97
  %v99 = vsub.f32 1.5, %v98
  %v100 = vmul.f32 %v95, %v99
  %vm101 = vweird.f32 %v62
  %vm102 = vweird.f32 %v95
  %vm103 = vmor %vm101, %vm102
  %v104 = vsel %vm103, %v95, %v100
  %v105 = vrsqrt.pop %v65
  %v106 = vmul.f32 %v105, %v65
  %v107 = vmul.f32 %v106, %v105
  %v108 = vmul.f32 0.5, %v107
  %v109 = vsub.f32 1.5, %v108
  %v110 = vmul.f32 %v105, %v109
  %vm111 = vweird.f32 %v65
  %vm112 = vweird.f32 %v105
  %vm113 = vmor %vm111, %vm112
  %v114 = vsel %vm113, %v105, %v110
  %v115 = vrsqrt.pop %v68
  %v116 = vmul.f32 %v115, %v68
  %v117 = vmul.f32 %v116, %v115
  %v118 = vmul.f32 0.5, %v117
  %v119 = vsub.f32 1.5, %v118
  %v120 = vmul.f32 %v115, %v119
  %vm121 = vweird.f32 %v68
  %vm122 = vweird.f32 %v115
  %vm123 = vmor %vm121, %vm122
  %v124 = vsel %vm123, %v115, %v120
  %v125 = vrsqrt.pop %v71
  %v126 = vmul.f32 %v125, %v71
  %v127 = vmul.f32 %v126, %v125
  %v128 = vmul.f32 0.5, %v127
  %v129 = vsub.f32 1.5, %v128
  %v130 = vmul.f32 %v125, %v129
  %vm131 = vweird.f32 %v71
  %vm132 = vweird.f32 %v125
  %vm133 = vmor %vm131, %vm132
  %v134 = vsel %vm133, %v125, %v130
  %v135 = vrsqrt.pop %v74
  %v136 = vmul.f32 %v135, %v74
  %v137 = vmul.f32 %v136, %v135
  %v138 = vmul.f32 0.5, %v137
  %v139 = vsub.f32 1.5, %v138
  %v140 = vmul.f32 %v135, %v139
  %vm141 = vweird.f32 %v74
  %vm142 = vweird.f32 %v135
  %vm143 = vmor %vm141, %vm142
  %v144 = vsel %vm143, %v135, %v140
  %v145 = vrsqrt.pop %v77
  %v146 = vmul.f32 %v145, %v77
  %v147 = vmul.f32 %v146, %v145
  %v148 = vmul.f32 0.5, %v147
  %v149 = vsub.f32 1.5, %v148
  %v150 = vmul.f32 %v145, %v149
  %vm151 = vweird.f32 %v77
  %vm152 = vweird.f32 %v145
  %vm153 = vmor %vm151, %vm152
  %v154 = vsel %vm153, %v145, %v150
  %v155 = vrsqrt.pop %v80
  %v156 = vmul.f32 %v155, %v80
  %v157 = vmul.f32 %v156, %v155
  %v158 = vmul.f32 0.5, %v157
  %v159 = vsub.f32 1.5, %v158
  %v160 = vmul.f32 %v155, %v159
  %vm161 = vweird.f32 %v80
  %vm162 = vweird.f32 %v155
  %vm163 = vmor %vm161, %vm162
  %v164 = vsel %vm163, %v155, %v160
  %v165 = vrsqrt.pop %v84
  %v166 = vmul.f32 %v165, %v84
  %v167 = vmul.f32 %v166, %v165
  %v168 = vmul.f32 0.5, %v167
  %v169 = vsub.f32 1.5, %v168
  %v170 = vmul.f32 %v165, %v169
  %vm171 = vweird.f32 %v84
  %vm172 = vweird.f32 %v165
  %vm173 = vmor %vm171, %vm172
  %v174 = vsel %vm173, %v165, %v170
  %v175 = vmul.f32 %v8, %v94
  %v176 = vmul.f32 %v9, %v104
  %v177 = vmul.f32 %v10, %v114
  %v178 = vmul.f32 %v11, %v124
  %v179 = vmul.f32 %v12, %v134
  %v180 = vmul.f32 %v13, %v144
  %v181 = vmul.f32 %v14, %v154
  %v182 = vmul.f32 %v15, %v164
  %v183 = vmul.f32 %v16, %v174
  %v184 = vsel %vm38, %v8, %v175
  %v185 = vsel %vm39, %v9, %v176
  %v186 = vsel %vm40, %v10, %v177
  %v187 = vsel %vm41, %v11, %v178
  %v188 = vsel %vm42, %v12, %v179
  %v189 = vsel %vm43, %v13, %v180
  %v190 = vsel %vm44, %v14, %v181
  %v191 = vsel %vm45, %v15, %v182
  %v192 = vsel %vm46, %v16, %v183
  %193 = vst.msk [vmem:[%s1] sm:$0xff] %vm56, %v184
  %194 = vst.msk [vmem:[%s1 + $0x8] sm:$0xff] %vm56, %v185
  %195 = vst.msk [vmem:[%s1 + $0x10] sm:$0xff] %vm56, %v186
  %196 = vst.msk [vmem:[%s1 + $0x18] sm:$0xff] %vm56, %v187
  %197 = vst.msk [vmem:[%s1 + $0x20] sm:$0xff] %vm56, %v188
  %198 = vst.msk [vmem:[%s1 + $0x28] sm:$0xff] %vm56, %v189
  %199 = vst.msk [vmem:[%s1 + $0x30] sm:$0xff] %vm56, %v190
  %200 = vst.msk [vmem:[%s1 + $0x38] sm:$0xff] %vm56, %v191
  %201 = vst.msk [vmem:[%s1 + $0x40] sm:$0x1] %vm81, %v192
  // Predicated region
  $region6: #{tpu_custom_call.1} parent=0 // pred_check
    _
  $region7: #{tpu_custom_call.1} parent=0 // pred_check_branch
    %203 = sbr.rel (0) target = $region9
  $region8: #{tpu_custom_call.1} parent=0 // pred_region
    _
  $region9: #{tpu_custom_call.1} parent=0 // pred_fallthru
    _
  // Predicated region
  $region10: #{tpu_custom_call.1} parent=0 // pred_check
    _
  $region11: #{tpu_custom_call.1} parent=0 // pred_check_branch
    %205 = sbr.rel (0) target = $region13
  $region12: #{tpu_custom_call.1} parent=0 // pred_region
    _
  $region13: #{tpu_custom_call.1} parent=0 // pred_fallthru
    _

</llo_original>
